<compile_context>
chip_gen: v6e
topology: v6e:2x2x1
jax: 0.10.0
libtpu: 0.0.40
codegen_flags: <defaults>
</compile_context>

<pallas_src>
import jax
import jax.numpy as jnp
from jax.experimental import pallas as pl
from jax.experimental.pallas import tpu as pltpu


def _sigmoid(z):
    # exp and approx reciprocal both run on the EUP slot (VALU stays free).
    return pl.reciprocal(1.0 + jnp.exp(-z), approx=True)


def difuv_kernel(
    dv_ref, dd_ref, ti_ref,
    w1_ref, b1_ref, w2_ref, b2_ref,
    wl1_ref, bl1_ref, wl2_ref, bl2_ref,
    ctxv_ref, ctxd_ref, bctx_ref,
    out_ref,
):
    f32 = jnp.float32
    bf16 = jnp.bfloat16
    x2d = wl1_ref.shape[1]
    x8d = wl2_ref.shape[1]
    ng = x2d + x8d

    # Cast the dominant streams to bf16 *inside* the kernel (hidden under DMA).
    dv = dv_ref[...].astype(bf16)          # (TILE_M, nf)
    dd = dd_ref[...].astype(bf16)          # (TILE_M, nf)
    ti = ti_ref[...]                       # (TILE_M, x_dim) f32

    # fc1 / fc2 (bf16 operands, f32 accumulate on the MXU)
    ws = jnp.dot(dv, w1_ref[...], preferred_element_type=f32) + b1_ref[...]
    wd = jnp.dot(dd, w2_ref[...], preferred_element_type=f32) + b2_ref[...]

    # All four ctx projections (gate1 | gate2 | bias1 | bias2) fused into two
    # matmuls against column-packed weights.  ws @ Wv + wd @ Wd == cat([ws,wd])
    # @ W, so this reproduces the torch.cat + Linear exactly.
    ctx = (jnp.dot(ws.astype(bf16), ctxv_ref[...], preferred_element_type=f32)
           + jnp.dot(wd.astype(bf16), ctxd_ref[...], preferred_element_type=f32)
           + bctx_ref[...])                # (TILE_M, 2*(x2d+x8d)) f32

    # Single sigmoid over the contiguous gate block [gate1 | gate2].
    gates = _sigmoid(ctx[:, :ng])
    gate1 = gates[:, :x2d]
    gate2 = gates[:, x2d:ng]
    bias1 = ctx[:, ng:ng + x2d]
    bias2 = ctx[:, ng + x2d:]

    # ConcatSquashLinear #1
    a1 = jnp.dot(ti.astype(bf16), wl1_ref[...],
                 preferred_element_type=f32) + bl1_ref[...]
    x2 = a1 * gate1 + bias1

    # ConcatSquashLinear #2
    a2 = jnp.dot(x2.astype(bf16), wl2_ref[...],
                 preferred_element_type=f32) + bl2_ref[...]
    out_ref[...] = (a2 * gate2 + bias2).astype(out_ref.dtype)


def make_params(key, num_features, x_dim):
    """Deterministic synthetic parameters (PyTorch-Linear-style scaling)."""
    x2d = x_dim // 2
    x8d = x_dim // 8
    ctx = 2 * x_dim
    ks = jax.random.split(key, 16)

    def lin(k, fan_in, fan_out, bias=True):
        kw, kb = jax.random.split(k)
        bound = 1.0 / jnp.sqrt(float(fan_in))
        w = jax.random.uniform(kw, (fan_in, fan_out), jnp.float32, -bound, bound)
        b = (jax.random.uniform(kb, (1, fan_out), jnp.float32, -bound, bound)
             if bias else None)
        return w, b

    p = {}
    p["w1"], p["b1"] = lin(ks[0], num_features, x_dim)
    p["w2"], p["b2"] = lin(ks[1], num_features, x_dim)
    # fc3 exists in __init__ but is unused in forward -> intentionally omitted.
    p["wl1"], p["bl1"] = lin(ks[2], x_dim, x2d)
    p["whg1"], p["bhg1"] = lin(ks[3], ctx, x2d)
    p["whb1"], _ = lin(ks[4], ctx, x2d, bias=False)
    p["wl2"], p["bl2"] = lin(ks[5], x_dim // 2, x8d)
    p["whg2"], p["bhg2"] = lin(ks[6], ctx, x8d)
    p["whb2"], _ = lin(ks[7], ctx, x8d, bias=False)
    return p


def prepare_params(params, x_dim, matmul_dtype=jnp.bfloat16):
    """One-time weight prep (outside the call path): bf16 cast of every matmul
    weight and column-packing of the ctx weights in [g1|g2|b1|b2] order."""
    x2d, x8d = x_dim // 2, x_dim // 8
    whg1, whb1 = params["whg1"], params["whb1"]
    whg2, whb2 = params["whg2"], params["whb2"]
    # ws-half rows (first x_dim) and wd-half rows (last x_dim), column-packed
    # in the order [gate1 | gate2 | bias1 | bias2] (single contiguous gate slice).
    ctxv = jnp.concatenate(
        [whg1[:x_dim], whg2[:x_dim], whb1[:x_dim], whb2[:x_dim]], axis=1)
    ctxd = jnp.concatenate(
        [whg1[x_dim:], whg2[x_dim:], whb1[x_dim:], whb2[x_dim:]], axis=1)
    bctx = jnp.concatenate(
        [params["bhg1"], params["bhg2"],
         jnp.zeros((1, x2d), jnp.float32), jnp.zeros((1, x8d), jnp.float32)],
        axis=1)
    md = matmul_dtype
    return {
        "w1": params["w1"].astype(md), "b1": params["b1"],
        "w2": params["w2"].astype(md), "b2": params["b2"],
        "wl1": params["wl1"].astype(md), "bl1": params["bl1"],
        "wl2": params["wl2"].astype(md), "bl2": params["bl2"],
        "ctxv": ctxv.astype(md), "ctxd": ctxd.astype(md), "bctx": bctx,
    }


def _vmem_budget_bytes():
    """Per-generation VMEM budget: ~75% of physical capacity, capped at 100 MiB
    (=> ~96 MiB on 128-MiB v5e/v6e, ~48 MiB on 64-MiB v7x)."""
    cap = None
    try:
        info = pltpu.get_tpu_info()
        cap = getattr(info, "vmem_capacity_bytes", None)
    except Exception:
        cap = None
    if not cap:
        cap = 64 * 1024 * 1024  # conservative default (v7x per-TC VMEM)
    return int(min(100 * 1024 * 1024, (3 * int(cap)) // 4))


def _choose_tile_m(M, num_features, x_dim, vmem_budget, weight_bytes):
    """Largest multiple-of-8 token tile such that:
       - double-buffered streamed tiles + double-buffered resident weights fit
         the per-generation VMEM budget,
       - each step streams at most ~8 MiB (per-step overhead ~0.35 us becomes
         negligible well before that),
       - the grid has >= 2 steps whenever M permits (megacore / pipelining)."""
    x8d = max(x_dim // 8, 1)
    per_row = 2 * num_features * 4 + x_dim * 4 + x8d * 4   # f32 streamed bytes
    avail = vmem_budget - 2 * weight_bytes - (4 << 20)
    tile = avail // (2 * per_row) if avail > 0 else 8
    tile = min(tile, max((8 << 20) // per_row, 8))          # ~8 MiB per step
    tile = min(tile, 2048)
    m_pad8 = ((M + 7) // 8) * 8
    if m_pad8 >= 16:
        tile = min(tile, m_pad8 // 2)                       # >= 2 grid steps
    tile = min(tile, m_pad8)
    tile = max(8, (int(tile) // 8) * 8)
    return tile


def difuv_forward(dif_v, dif_d, track_intensity, prep, x_dim, *, tile_m=None):
    B, T2, C, H, W = dif_v.shape
    nf = C * H * W
    M = B * T2
    x2d, x8d = x_dim // 2, x_dim // 8

    weight_args = (prep["w1"], prep["b1"], prep["w2"], prep["b2"],
                   prep["wl1"], prep["bl1"], prep["wl2"], prep["bl2"],
                   prep["ctxv"], prep["ctxd"], prep["bctx"])
    weight_bytes = sum(int(w.size) * w.dtype.itemsize for w in weight_args)

    vmem_budget = _vmem_budget_bytes()
    if tile_m is None:
        tile_m = _choose_tile_m(M, nf, x_dim, vmem_budget, weight_bytes)
    m_pad = ((M + tile_m - 1) // tile_m) * tile_m

    # Glue: flatten exactly like dif_v.view(B, T2, -1).  No dtype cast here --
    # the f32 arrays are streamed straight from HBM and cast in-kernel.
    dv = dif_v.reshape(M, nf)
    dd = dif_d.reshape(M, nf)
    ti = track_intensity.reshape(M, x_dim).astype(jnp.float32)
    if m_pad != M:
        pad = m_pad - M
        dv = jnp.pad(dv, ((0, pad), (0, 0)))
        dd = jnp.pad(dd, ((0, pad), (0, 0)))
        ti = jnp.pad(ti, ((0, pad), (0, 0)))

    def row_spec(cols):
        return pl.BlockSpec((tile_m, cols), lambda i: (i, 0))

    def full_spec(arr):
        return pl.BlockSpec(arr.shape, lambda i: (0, 0))

    in_specs = ([row_spec(nf), row_spec(nf), row_spec(x_dim)]
                + [full_spec(w) for w in weight_args])
    out_specs = pl.BlockSpec((tile_m, x8d), lambda i: (i, 0))

    # Advisory cost estimate for the XLA scheduler.
    flops = int(2 * m_pad * (2 * nf * x_dim                 # fc1 + fc2
                             + 2 * x_dim * 2 * (x2d + x8d)  # packed ctx matmuls
                             + x_dim * x2d + x2d * x8d))    # _layer matmuls
    transcendentals = int(m_pad * (x2d + x8d))
    per_row_bytes = 2 * nf * 4 + x_dim * 4 + x8d * 4
    bytes_accessed = int(m_pad * per_row_bytes + weight_bytes)

    # Real VMEM requirement: double-buffered streamed tiles + double-buffered
    # resident weights + pipeline slack, clamped to the per-generation budget.
    vmem_needed = 2 * tile_m * per_row_bytes + 2 * weight_bytes + (4 << 20)
    vmem_limit = int(min(vmem_budget, max(vmem_needed, 16 << 20)))

    out = pl.pallas_call(
        difuv_kernel,
        out_shape=jax.ShapeDtypeStruct((m_pad, x8d), jnp.float32),
        grid=(m_pad // tile_m,),
        in_specs=in_specs,
        out_specs=out_specs,
        compiler_params=pltpu.CompilerParams(
            dimension_semantics=("parallel",),
            vmem_limit_bytes=vmem_limit),
        cost_estimate=pl.CostEstimate(
            flops=flops, transcendentals=transcendentals,
            bytes_accessed=bytes_accessed),
    )(dv, dd, ti, *weight_args)

    return out[:M].reshape(B, T2, x8d)


def difuv_reference(dif_v, dif_d, track_intensity, params, x_dim,
                    quantized=False):
    """Pure-JAX reference replicating the PyTorch forward.  With
    quantized=True the matmul operands are bf16-rounded exactly like the
    kernel's MXU path (accumulation stays f32)."""
    def q(a):
        return a.astype(jnp.bfloat16).astype(jnp.float32) if quantized else a

    B, T2 = dif_v.shape[:2]
    dv = q(dif_v.reshape(B, T2, -1))
    dd = q(dif_d.reshape(B, T2, -1))
    ws = dv @ q(params["w1"]) + params["b1"][0]
    wd = dd @ q(params["w2"]) + params["b2"][0]
    va_di = jnp.concatenate([ws, wd], axis=-1)

    def csl(ctx, x, wl, bl, whg, bhg, whb):
        gate = jax.nn.sigmoid(q(ctx) @ q(whg) + bhg[0])
        bias = q(ctx) @ q(whb)
        a = q(x) @ q(wl) + bl[0]
        return a * gate + bias

    x2 = csl(va_di, track_intensity, params["wl1"], params["bl1"],
             params["whg1"], params["bhg1"], params["whb1"])
    x3 = csl(va_di, x2, params["wl2"], params["bl2"],
             params["whg2"], params["bhg2"], params["whb2"])
    return x3


if __name__ == "__main__":
    # Small shapes: B=2, T2=8, C=4, H=4, W=4 => num_features=64; x_dim=32.
    B, T2, C, H, W = 2, 8, 4, 4, 4
    num_features = C * H * W
    x_dim = 32

    key = jax.random.PRNGKey(0)
    k_dv, k_dd, k_ti, k_p = jax.random.split(key, 4)

    dif_v = jax.random.normal(k_dv, (B, T2, C, H, W), jnp.float32)
    dif_d = jax.random.normal(k_dd, (B, T2, C, H, W), jnp.float32)
    track_intensity = jax.random.normal(k_ti, (B, T2, x_dim), jnp.float32)

    params = make_params(k_p, num_features, x_dim)
    prep = prepare_params(params, x_dim)          # one-time weight prep

    # Auto tile selection: M=16 -> tile_m=8 -> a 2-step parallel grid.
    out = difuv_forward(dif_v, dif_d, track_intensity, prep, x_dim)
    out = jax.block_until_ready(out)

    # Compare against a reference using the same bf16-rounded matmul operands
    # (f32 math otherwise); remaining diff is only MXU accumulation order and
    # the EUP approximate reciprocal inside the sigmoid.
    ref = difuv_reference(dif_v, dif_d, track_intensity, params, x_dim,
                          quantized=True)
    assert out.shape == (B, T2, x_dim // 8), out.shape
    assert jnp.allclose(out, ref, atol=1e-2, rtol=1e-2), "mismatch vs reference"

    print("KERNEL_OK")
</pallas_src>

<mosaic_0001>
module attributes {stable_mosaic.version = 11 : i64} {
  func.func @difuv_kernel(%arg0: i32, %arg1: memref<8x64xf32, #tpu.memory_space<vmem>>, %arg2: memref<8x64xf32, #tpu.memory_space<vmem>>, %arg3: memref<8x32xf32, #tpu.memory_space<vmem>>, %arg4: memref<64x32xbf16, #tpu.memory_space<vmem>>, %arg5: memref<1x32xf32, #tpu.memory_space<vmem>>, %arg6: memref<64x32xbf16, #tpu.memory_space<vmem>>, %arg7: memref<1x32xf32, #tpu.memory_space<vmem>>, %arg8: memref<32x16xbf16, #tpu.memory_space<vmem>>, %arg9: memref<1x16xf32, #tpu.memory_space<vmem>>, %arg10: memref<16x4xbf16, #tpu.memory_space<vmem>>, %arg11: memref<1x4xf32, #tpu.memory_space<vmem>>, %arg12: memref<32x40xbf16, #tpu.memory_space<vmem>>, %arg13: memref<32x40xbf16, #tpu.memory_space<vmem>>, %arg14: memref<1x40xf32, #tpu.memory_space<vmem>>, %arg15: memref<8x4xf32, #tpu.memory_space<vmem>>) attributes {dimension_semantics = [#tpu.dimension_semantics<parallel>], iteration_bounds = array<i64: 2>, scalar_prefetch = 0 : i64, scratch_operands = 0 : i64, tpu.core_type = #tpu.core_type<tc>, window_params = [{transform_indices = @transform_0, window_bounds = array<i64: 8, 64>}, {transform_indices = @transform_1, window_bounds = array<i64: 8, 64>}, {transform_indices = @transform_2, window_bounds = array<i64: 8, 32>}, {pipeline_mode = #tpu.pipeline_mode<synchronous>, transform_indices = @transform_3, window_bounds = array<i64: 64, 32>}, {pipeline_mode = #tpu.pipeline_mode<synchronous>, transform_indices = @transform_4, window_bounds = array<i64: 1, 32>}, {pipeline_mode = #tpu.pipeline_mode<synchronous>, transform_indices = @transform_5, window_bounds = array<i64: 64, 32>}, {pipeline_mode = #tpu.pipeline_mode<synchronous>, transform_indices = @transform_6, window_bounds = array<i64: 1, 32>}, {pipeline_mode = #tpu.pipeline_mode<synchronous>, transform_indices = @transform_7, window_bounds = array<i64: 32, 16>}, {pipeline_mode = #tpu.pipeline_mode<synchronous>, transform_indices = @transform_8, window_bounds = array<i64: 1, 16>}, {pipeline_mode = #tpu.pipeline_mode<synchronous>, transform_indices = @transform_9, window_bounds = array<i64: 16, 4>}, {pipeline_mode = #tpu.pipeline_mode<synchronous>, transform_indices = @transform_10, window_bounds = array<i64: 1, 4>}, {pipeline_mode = #tpu.pipeline_mode<synchronous>, transform_indices = @transform_11, window_bounds = array<i64: 32, 40>}, {pipeline_mode = #tpu.pipeline_mode<synchronous>, transform_indices = @transform_12, window_bounds = array<i64: 32, 40>}, {pipeline_mode = #tpu.pipeline_mode<synchronous>, transform_indices = @transform_13, window_bounds = array<i64: 1, 40>}, {transform_indices = @transform_14, window_bounds = array<i64: 8, 4>}]} {
    %c0 = arith.constant 0 : index
    %c0_0 = arith.constant 0 : index
    %0 = vector.load %arg1[%c0, %c0_0] : memref<8x64xf32, #tpu.memory_space<vmem>>, vector<8x64xf32>
    %1 = arith.truncf %0 : vector<8x64xf32> to vector<8x64xbf16>
    %c0_1 = arith.constant 0 : index
    %c0_2 = arith.constant 0 : index
    %2 = vector.load %arg2[%c0_1, %c0_2] : memref<8x64xf32, #tpu.memory_space<vmem>>, vector<8x64xf32>
    %3 = arith.truncf %2 : vector<8x64xf32> to vector<8x64xbf16>
    %c0_3 = arith.constant 0 : index
    %c0_4 = arith.constant 0 : index
    %4 = vector.load %arg3[%c0_3, %c0_4] : memref<8x32xf32, #tpu.memory_space<vmem>>, vector<8x32xf32>
    %c0_5 = arith.constant 0 : index
    %c0_6 = arith.constant 0 : index
    %5 = vector.load %arg4[%c0_5, %c0_6] : memref<64x32xbf16, #tpu.memory_space<vmem>>, vector<64x32xbf16>
    %cst = arith.constant dense<0.000000e+00> : vector<8x32xf32>
    %6 = tpu.matmul %1, %5, %cst {dimension_numbers = #tpu.dot_dimension_numbers<[1], [0], [0], [1], [0, 0, 1, 1], [], []>} : vector<8x64xbf16>, vector<64x32xbf16>, vector<8x32xf32> -> vector<8x32xf32>
    %c0_7 = arith.constant 0 : index
    %c0_8 = arith.constant 0 : index
    %7 = vector.load %arg5[%c0_7, %c0_8] : memref<1x32xf32, #tpu.memory_space<vmem>>, vector<1x32xf32>
    %8 = vector.broadcast %7 : vector<1x32xf32> to vector<8x32xf32>
    %9 = arith.addf %6, %8 : vector<8x32xf32>
    %c0_9 = arith.constant 0 : index
    %c0_10 = arith.constant 0 : index
    %10 = vector.load %arg6[%c0_9, %c0_10] : memref<64x32xbf16, #tpu.memory_space<vmem>>, vector<64x32xbf16>
    %cst_11 = arith.constant dense<0.000000e+00> : vector<8x32xf32>
    %11 = tpu.matmul %3, %10, %cst_11 {dimension_numbers = #tpu.dot_dimension_numbers<[1], [0], [0], [1], [0, 0, 1, 1], [], []>} : vector<8x64xbf16>, vector<64x32xbf16>, vector<8x32xf32> -> vector<8x32xf32>
    %c0_12 = arith.constant 0 : index
    %c0_13 = arith.constant 0 : index
    %12 = vector.load %arg7[%c0_12, %c0_13] : memref<1x32xf32, #tpu.memory_space<vmem>>, vector<1x32xf32>
    %13 = vector.broadcast %12 : vector<1x32xf32> to vector<8x32xf32>
    %14 = arith.addf %11, %13 : vector<8x32xf32>
    %15 = arith.truncf %9 : vector<8x32xf32> to vector<8x32xbf16>
    %c0_14 = arith.constant 0 : index
    %c0_15 = arith.constant 0 : index
    %16 = vector.load %arg12[%c0_14, %c0_15] : memref<32x40xbf16, #tpu.memory_space<vmem>>, vector<32x40xbf16>
    %cst_16 = arith.constant dense<0.000000e+00> : vector<8x40xf32>
    %17 = tpu.matmul %15, %16, %cst_16 {dimension_numbers = #tpu.dot_dimension_numbers<[1], [0], [0], [1], [0, 0, 1, 1], [], []>} : vector<8x32xbf16>, vector<32x40xbf16>, vector<8x40xf32> -> vector<8x40xf32>
    %18 = arith.truncf %14 : vector<8x32xf32> to vector<8x32xbf16>
    %c0_17 = arith.constant 0 : index
    %c0_18 = arith.constant 0 : index
    %19 = vector.load %arg13[%c0_17, %c0_18] : memref<32x40xbf16, #tpu.memory_space<vmem>>, vector<32x40xbf16>
    %cst_19 = arith.constant dense<0.000000e+00> : vector<8x40xf32>
    %20 = tpu.matmul %18, %19, %cst_19 {dimension_numbers = #tpu.dot_dimension_numbers<[1], [0], [0], [1], [0, 0, 1, 1], [], []>} : vector<8x32xbf16>, vector<32x40xbf16>, vector<8x40xf32> -> vector<8x40xf32>
    %21 = arith.addf %17, %20 : vector<8x40xf32>
    %c0_20 = arith.constant 0 : index
    %c0_21 = arith.constant 0 : index
    %22 = vector.load %arg14[%c0_20, %c0_21] : memref<1x40xf32, #tpu.memory_space<vmem>>, vector<1x40xf32>
    %23 = vector.broadcast %22 : vector<1x40xf32> to vector<8x40xf32>
    %24 = arith.addf %21, %23 : vector<8x40xf32>
    %25 = vector.extract_strided_slice %24 {offsets = [0, 0], sizes = [8, 20], strides = [1, 1]} : vector<8x40xf32> to vector<8x20xf32>
    %cst_22 = arith.constant 0.000000e+00 : f32
    %26 = vector.broadcast %cst_22 : f32 to vector<8x20xf32>
    %27 = arith.subf %26, %25 : vector<8x20xf32>
    %28 = math.exp %27 : vector<8x20xf32>
    %cst_23 = arith.constant 1.000000e+00 : f32
    %29 = vector.broadcast %cst_23 : f32 to vector<8x20xf32>
    %30 = arith.addf %29, %28 : vector<8x20xf32>
    %31 = tpu.reciprocal %30 {approx = true} : vector<8x20xf32> -> vector<8x20xf32>
    %32 = vector.extract_strided_slice %31 {offsets = [0, 0], sizes = [8, 16], strides = [1, 1]} : vector<8x20xf32> to vector<8x16xf32>
    %33 = vector.extract_strided_slice %31 {offsets = [0, 16], sizes = [8, 4], strides = [1, 1]} : vector<8x20xf32> to vector<8x4xf32>
    %34 = vector.extract_strided_slice %24 {offsets = [0, 20], sizes = [8, 16], strides = [1, 1]} : vector<8x40xf32> to vector<8x16xf32>
    %35 = vector.extract_strided_slice %24 {offsets = [0, 36], sizes = [8, 4], strides = [1, 1]} : vector<8x40xf32> to vector<8x4xf32>
    %36 = arith.truncf %4 : vector<8x32xf32> to vector<8x32xbf16>
    %c0_24 = arith.constant 0 : index
    %c0_25 = arith.constant 0 : index
    %37 = vector.load %arg8[%c0_24, %c0_25] : memref<32x16xbf16, #tpu.memory_space<vmem>>, vector<32x16xbf16>
    %cst_26 = arith.constant dense<0.000000e+00> : vector<8x16xf32>
    %38 = tpu.matmul %36, %37, %cst_26 {dimension_numbers = #tpu.dot_dimension_numbers<[1], [0], [0], [1], [0, 0, 1, 1], [], []>} : vector<8x32xbf16>, vector<32x16xbf16>, vector<8x16xf32> -> vector<8x16xf32>
    %c0_27 = arith.constant 0 : index
    %c0_28 = arith.constant 0 : index
    %39 = vector.load %arg9[%c0_27, %c0_28] : memref<1x16xf32, #tpu.memory_space<vmem>>, vector<1x16xf32>
    %40 = vector.broadcast %39 : vector<1x16xf32> to vector<8x16xf32>
    %41 = arith.addf %38, %40 : vector<8x16xf32>
    %42 = arith.mulf %41, %32 : vector<8x16xf32>
    %43 = arith.addf %42, %34 : vector<8x16xf32>
    %44 = arith.truncf %43 : vector<8x16xf32> to vector<8x16xbf16>
    %c0_29 = arith.constant 0 : index
    %c0_30 = arith.constant 0 : index
    %45 = vector.load %arg10[%c0_29, %c0_30] : memref<16x4xbf16, #tpu.memory_space<vmem>>, vector<16x4xbf16>
    %cst_31 = arith.constant dense<0.000000e+00> : vector<8x4xf32>
    %46 = tpu.matmul %44, %45, %cst_31 {dimension_numbers = #tpu.dot_dimension_numbers<[1], [0], [0], [1], [0, 0, 1, 1], [], []>} : vector<8x16xbf16>, vector<16x4xbf16>, vector<8x4xf32> -> vector<8x4xf32>
    %c0_32 = arith.constant 0 : index
    %c0_33 = arith.constant 0 : index
    %47 = vector.load %arg11[%c0_32, %c0_33] : memref<1x4xf32, #tpu.memory_space<vmem>>, vector<1x4xf32>
    %48 = vector.broadcast %47 : vector<1x4xf32> to vector<8x4xf32>
    %49 = arith.addf %46, %48 : vector<8x4xf32>
    %50 = arith.mulf %49, %33 : vector<8x4xf32>
    %51 = arith.addf %50, %35 : vector<8x4xf32>
    %c0_34 = arith.constant 0 : index
    %c0_35 = arith.constant 0 : index
    %52 = vector.load %arg15[%c0_34, %c0_35] : memref<8x4xf32, #tpu.memory_space<vmem>>, vector<8x4xf32>
    tpu.vector_store %arg15[%c0_34, %c0_35], %51 {strides = array<i32>} : memref<8x4xf32, #tpu.memory_space<vmem>>, vector<8x4xf32>,
    return
  }
  func.func @transform_0(%arg0: i32) -> (i32, i32) {
    %c0_i32 = arith.constant 0 : i32
    %c0_i32_0 = arith.constant 0 : i32
    return %arg0, %c0_i32 : i32, i32
  }
  func.func @transform_1(%arg0: i32) -> (i32, i32) {
    %c0_i32 = arith.constant 0 : i32
    %c0_i32_0 = arith.constant 0 : i32
    return %arg0, %c0_i32 : i32, i32
  }
  func.func @transform_2(%arg0: i32) -> (i32, i32) {
    %c0_i32 = arith.constant 0 : i32
    %c0_i32_0 = arith.constant 0 : i32
    return %arg0, %c0_i32 : i32, i32
  }
  func.func @transform_3(%arg0: i32) -> (i32, i32) {
    %c0_i32 = arith.constant 0 : i32
    %c0_i32_0 = arith.constant 0 : i32
    %c0_i32_1 = arith.constant 0 : i32
    return %c0_i32, %c0_i32_0 : i32, i32
  }
  func.func @transform_4(%arg0: i32) -> (i32, i32) {
    %c0_i32 = arith.constant 0 : i32
    %c0_i32_0 = arith.constant 0 : i32
    %c0_i32_1 = arith.constant 0 : i32
    return %c0_i32, %c0_i32_0 : i32, i32
  }
  func.func @transform_5(%arg0: i32) -> (i32, i32) {
    %c0_i32 = arith.constant 0 : i32
    %c0_i32_0 = arith.constant 0 : i32
    %c0_i32_1 = arith.constant 0 : i32
    return %c0_i32, %c0_i32_0 : i32, i32
  }
  func.func @transform_6(%arg0: i32) -> (i32, i32) {
    %c0_i32 = arith.constant 0 : i32
    %c0_i32_0 = arith.constant 0 : i32
    %c0_i32_1 = arith.constant 0 : i32
    return %c0_i32, %c0_i32_0 : i32, i32
  }
  func.func @transform_7(%arg0: i32) -> (i32, i32) {
    %c0_i32 = arith.constant 0 : i32
    %c0_i32_0 = arith.constant 0 : i32
    %c0_i32_1 = arith.constant 0 : i32
    return %c0_i32, %c0_i32_0 : i32, i32
  }
  func.func @transform_8(%arg0: i32) -> (i32, i32) {
    %c0_i32 = arith.constant 0 : i32
    %c0_i32_0 = arith.constant 0 : i32
    %c0_i32_1 = arith.constant 0 : i32
    return %c0_i32, %c0_i32_0 : i32, i32
  }
  func.func @transform_9(%arg0: i32) -> (i32, i32) {
    %c0_i32 = arith.constant 0 : i32
    %c0_i32_0 = arith.constant 0 : i32
    %c0_i32_1 = arith.constant 0 : i32
    return %c0_i32, %c0_i32_0 : i32, i32
  }
  func.func @transform_10(%arg0: i32) -> (i32, i32) {
    %c0_i32 = arith.constant 0 : i32
    %c0_i32_0 = arith.constant 0 : i32
    %c0_i32_1 = arith.constant 0 : i32
    return %c0_i32, %c0_i32_0 : i32, i32
  }
  func.func @transform_11(%arg0: i32) -> (i32, i32) {
    %c0_i32 = arith.constant 0 : i32
    %c0_i32_0 = arith.constant 0 : i32
    %c0_i32_1 = arith.constant 0 : i32
    return %c0_i32, %c0_i32_0 : i32, i32
  }
  func.func @transform_12(%arg0: i32) -> (i32, i32) {
    %c0_i32 = arith.constant 0 : i32
    %c0_i32_0 = arith.constant 0 : i32
    %c0_i32_1 = arith.constant 0 : i32
    return %c0_i32, %c0_i32_0 : i32, i32
  }
  func.func @transform_13(%arg0: i32) -> (i32, i32) {
    %c0_i32 = arith.constant 0 : i32
    %c0_i32_0 = arith.constant 0 : i32
    %c0_i32_1 = arith.constant 0 : i32
    return %c0_i32, %c0_i32_0 : i32, i32
  }
  func.func @transform_14(%arg0: i32) -> (i32, i32) {
    %c0_i32 = arith.constant 0 : i32
    %c0_i32_0 = arith.constant 0 : i32
    return %arg0, %c0_i32 : i32, i32
  }
}

</mosaic_0001>

<llo_original>
// kernel: tpu_custom_call.1
$region0: #{tpu_custom_call.1}
  #allocation0 [shape = 'u32[]', space=smem, size = 0x4, offset = 0x4, fixed_abs, tag = 'smem constant byte address 0x4 - core index']
  #allocation1 [shape = 'u32[144,128]{1,0:T(1,128)}', space=vmem, size = 0x12000, scoped, tag = 'internal scratch']
  %s0 = inlined_call_operand.vmem [shape: f32[16,64], index: 0, kind: input, shape index: {}]
  %s1 = inlined_call_operand.vmem [shape: f32[16,64], index: 1, kind: input, shape index: {}]
  %s2 = inlined_call_operand.vmem [shape: f32[16,32], index: 2, kind: input, shape index: {}]
  %s3 = inlined_call_operand.vmem [shape: bf16[64,32], index: 3, kind: input, shape index: {}]
  %s4 = inlined_call_operand.vmem [shape: f32[1,32], index: 4, kind: input, shape index: {}]
  %s5 = inlined_call_operand.vmem [shape: bf16[64,32], index: 5, kind: input, shape index: {}]
  %s6 = inlined_call_operand.vmem [shape: f32[1,32], index: 6, kind: input, shape index: {}]
  %s7 = inlined_call_operand.vmem [shape: bf16[32,16], index: 7, kind: input, shape index: {}]
  %s8 = inlined_call_operand.vmem [shape: f32[1,16], index: 8, kind: input, shape index: {}]
  %s9 = inlined_call_operand.vmem [shape: bf16[16,4], index: 9, kind: input, shape index: {}]
  %s10 = inlined_call_operand.vmem [shape: f32[1,4], index: 10, kind: input, shape index: {}]
  %s11 = inlined_call_operand.vmem [shape: bf16[32,40], index: 11, kind: input, shape index: {}]
  %s12 = inlined_call_operand.vmem [shape: bf16[32,40], index: 12, kind: input, shape index: {}]
  %s13 = inlined_call_operand.vmem [shape: f32[1,40], index: 13, kind: input, shape index: {}]
  %s14 = inlined_call_operand.vmem [shape: f32[16,4], index: 14, kind: output, shape index: {}]
  %s15 = sld [smem:[#allocation0]]
  $region89: #{tpu_custom_call.1} parent=0
    _
  %s17 = ssub.s32 1, %s15
  %s18 = scalar_select 0, %s17, %s15
  loop: start=0, step=1, limit=4
  $region2: #{tpu_custom_call.1} parent=0 // loop_pre_header
    _
  $region3: #{tpu_custom_call.1} parent=0 // loop_header
    %s20 = sphi 0, %s24
    %p21 = scmp.ge.s32.totalorder %s20, 4
    %s30 = sphi 0, %s32
    %s33 = sphi 0, %s30
    %s34 = sphi 0, %s33
    %s50 = sphi 0, %s34
    %s56 = sphi 0, %s58
    %s59 = sphi 0, %s56
    %s60 = sphi 0, %s59
    %s76 = sphi 0, %s60
    %s82 = sphi 0, %s84
    %s85 = sphi 0, %s82
    %s86 = sphi 0, %s85
    %s102 = sphi 0, %s86
    %s106 = sphi 0, %s106
    %s108 = sphi 0, %s106
    %s109 = sphi 0, %s108
    %s123 = sphi 0, %s109
    %s127 = sphi 0, %s127
    %s129 = sphi 0, %s127
    %s130 = sphi 0, %s129
    %s144 = sphi 0, %s130
    %s148 = sphi 0, %s148
    %s150 = sphi 0, %s148
    %s151 = sphi 0, %s150
    %s165 = sphi 0, %s151
    %s169 = sphi 0, %s169
    %s171 = sphi 0, %s169
    %s172 = sphi 0, %s171
    %s186 = sphi 0, %s172
    %s190 = sphi 0, %s190
    %s192 = sphi 0, %s190
    %s193 = sphi 0, %s192
    %s207 = sphi 0, %s193
    %s211 = sphi 0, %s211
    %s213 = sphi 0, %s211
    %s214 = sphi 0, %s213
    %s228 = sphi 0, %s214
    %s232 = sphi 0, %s232
    %s234 = sphi 0, %s232
    %s235 = sphi 0, %s234
    %s249 = sphi 0, %s235
    %s253 = sphi 0, %s253
    %s255 = sphi 0, %s253
    %s256 = sphi 0, %s255
    %s270 = sphi 0, %s256
    %s274 = sphi 0, %s274
    %s276 = sphi 0, %s274
    %s277 = sphi 0, %s276
    %s291 = sphi 0, %s277
    %s295 = sphi 0, %s295
    %s297 = sphi 0, %s295
    %s298 = sphi 0, %s297
    %s312 = sphi 0, %s298
    %s316 = sphi 0, %s316
    %s318 = sphi 0, %s316
    %s319 = sphi 0, %s318
    %s333 = sphi 0, %s319
    %s339 = sphi 0, %s341
    %s342 = sphi 0, %s339
    %s343 = sphi 0, %s342
    %s359 = sphi 0, %s343
  $region4: #{tpu_custom_call.1} parent=0 // loop_header_branch
    %23 = sbr.rel (%p21) target = $region8
  $region5: #{tpu_custom_call.1} parent=0 // loop_body
    %s25 = ssub.s32 %s20, 1
    %s26 = ssub.s32 %s20, 2
    %s27 = sadd.s32 %s20, 1
    %s28 = ssub.s32 %s20, %s27
    %p29 = scmp.eq.s32.totalorder %s28, 0
    %s31 = sadd.s32 %s30, 1
    %s32 = scalar_select %p29, %s30, %s31
    %p35 = pneg %p29
    %p36 = scmp.eq.s32.totalorder %s20, 1
    %p37 = por %p35, %p36
    %p38 = scmp.ne.s32.totalorder %s30, %s33
    %p39 = scmp.eq.s32.totalorder %s20, 0
    %p40 = por %p38, %p39
    %p41 = scmp.ne.s32.totalorder %s30, %s33
    %p42 = scmp.eq.s32.totalorder %s25, 1
    %p43 = por %p41, %p42
    %p44 = scmp.ne.s32.totalorder %s33, %s34
    %p45 = scmp.eq.s32.totalorder %s25, 0
    %p46 = por %p44, %p45
    %p47 = scmp.ne.s32.totalorder %s33, %s34
    %p48 = scmp.eq.s32.totalorder %s26, 1
    %p49 = por %p47, %p48
    %p51 = scmp.ne.s32.totalorder %s34, %s50
    %p52 = scmp.eq.s32.totalorder %s26, 0
    %p53 = por %p51, %p52
    %s54 = ssub.s32 %s20, %s27
    %p55 = scmp.eq.s32.totalorder %s54, 0
    %s57 = sadd.s32 %s56, 1
    %s58 = scalar_select %p55, %s56, %s57
    %p61 = pneg %p55
    %p62 = scmp.eq.s32.totalorder %s20, 1
    %p63 = por %p61, %p62
    %p64 = scmp.ne.s32.totalorder %s56, %s59
    %p65 = scmp.eq.s32.totalorder %s20, 0
    %p66 = por %p64, %p65
    %p67 = scmp.ne.s32.totalorder %s56, %s59
    %p68 = scmp.eq.s32.totalorder %s25, 1
    %p69 = por %p67, %p68
    %p70 = scmp.ne.s32.totalorder %s59, %s60
    %p71 = scmp.eq.s32.totalorder %s25, 0
    %p72 = por %p70, %p71
    %p73 = scmp.ne.s32.totalorder %s59, %s60
    %p74 = scmp.eq.s32.totalorder %s26, 1
    %p75 = por %p73, %p74
    %p77 = scmp.ne.s32.totalorder %s60, %s76
    %p78 = scmp.eq.s32.totalorder %s26, 0
    %p79 = por %p77, %p78
    %s80 = ssub.s32 %s20, %s27
    %p81 = scmp.eq.s32.totalorder %s80, 0
    %s83 = sadd.s32 %s82, 1
    %s84 = scalar_select %p81, %s82, %s83
    %p87 = pneg %p81
    %p88 = scmp.eq.s32.totalorder %s20, 1
    %p89 = por %p87, %p88
    %p90 = scmp.ne.s32.totalorder %s82, %s85
    %p91 = scmp.eq.s32.totalorder %s20, 0
    %p92 = por %p90, %p91
    %p93 = scmp.ne.s32.totalorder %s82, %s85
    %p94 = scmp.eq.s32.totalorder %s25, 1
    %p95 = por %p93, %p94
    %p96 = scmp.ne.s32.totalorder %s85, %s86
    %p97 = scmp.eq.s32.totalorder %s25, 0
    %p98 = por %p96, %p97
    %p99 = scmp.ne.s32.totalorder %s85, %s86
    %p100 = scmp.eq.s32.totalorder %s26, 1
    %p101 = por %p99, %p100
    %p103 = scmp.ne.s32.totalorder %s86, %s102
    %p104 = scmp.eq.s32.totalorder %s26, 0
    %p105 = por %p103, %p104
    %s107 = sadd.s32 %s106, 1
    %p110 = scmp.eq.s32.totalorder %s20, 1
    %p111 = scmp.ne.s32.totalorder %s106, %s108
    %p112 = scmp.eq.s32.totalorder %s20, 0
    %p113 = por %p111, %p112
    %p114 = scmp.ne.s32.totalorder %s106, %s108
    %p115 = scmp.eq.s32.totalorder %s25, 1
    %p116 = por %p114, %p115
    %p117 = scmp.ne.s32.totalorder %s108, %s109
    %p118 = scmp.eq.s32.totalorder %s25, 0
    %p119 = por %p117, %p118
    %p120 = scmp.ne.s32.totalorder %s108, %s109
    %p121 = scmp.eq.s32.totalorder %s26, 1
    %p122 = por %p120, %p121
    %p124 = scmp.ne.s32.totalorder %s109, %s123
    %p125 = scmp.eq.s32.totalorder %s26, 0
    %p126 = por %p124, %p125
    %s128 = sadd.s32 %s127, 1
    %p131 = scmp.eq.s32.totalorder %s20, 1
    %p132 = scmp.ne.s32.totalorder %s127, %s129
    %p133 = scmp.eq.s32.totalorder %s20, 0
    %p134 = por %p132, %p133
    %p135 = scmp.ne.s32.totalorder %s127, %s129
    %p136 = scmp.eq.s32.totalorder %s25, 1
    %p137 = por %p135, %p136
    %p138 = scmp.ne.s32.totalorder %s129, %s130
    %p139 = scmp.eq.s32.totalorder %s25, 0
    %p140 = por %p138, %p139
    %p141 = scmp.ne.s32.totalorder %s129, %s130
    %p142 = scmp.eq.s32.totalorder %s26, 1
    %p143 = por %p141, %p142
    %p145 = scmp.ne.s32.totalorder %s130, %s144
    %p146 = scmp.eq.s32.totalorder %s26, 0
    %p147 = por %p145, %p146
    %s149 = sadd.s32 %s148, 1
    %p152 = scmp.eq.s32.totalorder %s20, 1
    %p153 = scmp.ne.s32.totalorder %s148, %s150
    %p154 = scmp.eq.s32.totalorder %s20, 0
    %p155 = por %p153, %p154
    %p156 = scmp.ne.s32.totalorder %s148, %s150
    %p157 = scmp.eq.s32.totalorder %s25, 1
    %p158 = por %p156, %p157
    %p159 = scmp.ne.s32.totalorder %s150, %s151
    %p160 = scmp.eq.s32.totalorder %s25, 0
    %p161 = por %p159, %p160
    %p162 = scmp.ne.s32.totalorder %s150, %s151
    %p163 = scmp.eq.s32.totalorder %s26, 1
    %p164 = por %p162, %p163
    %p166 = scmp.ne.s32.totalorder %s151, %s165
    %p167 = scmp.eq.s32.totalorder %s26, 0
    %p168 = por %p166, %p167
    %s170 = sadd.s32 %s169, 1
    %p173 = scmp.eq.s32.totalorder %s20, 1
    %p174 = scmp.ne.s32.totalorder %s169, %s171
    %p175 = scmp.eq.s32.totalorder %s20, 0
    %p176 = por %p174, %p175
    %p177 = scmp.ne.s32.totalorder %s169, %s171
    %p178 = scmp.eq.s32.totalorder %s25, 1
    %p179 = por %p177, %p178
    %p180 = scmp.ne.s32.totalorder %s171, %s172
    %p181 = scmp.eq.s32.totalorder %s25, 0
    %p182 = por %p180, %p181
    %p183 = scmp.ne.s32.totalorder %s171, %s172
    %p184 = scmp.eq.s32.totalorder %s26, 1
    %p185 = por %p183, %p184
    %p187 = scmp.ne.s32.totalorder %s172, %s186
    %p188 = scmp.eq.s32.totalorder %s26, 0
    %p189 = por %p187, %p188
    %s191 = sadd.s32 %s190, 1
    %p194 = scmp.eq.s32.totalorder %s20, 1
    %p195 = scmp.ne.s32.totalorder %s190, %s192
    %p196 = scmp.eq.s32.totalorder %s20, 0
    %p197 = por %p195, %p196
    %p198 = scmp.ne.s32.totalorder %s190, %s192
    %p199 = scmp.eq.s32.totalorder %s25, 1
    %p200 = por %p198, %p199
    %p201 = scmp.ne.s32.totalorder %s192, %s193
    %p202 = scmp.eq.s32.totalorder %s25, 0
    %p203 = por %p201, %p202
    %p204 = scmp.ne.s32.totalorder %s192, %s193
    %p205 = scmp.eq.s32.totalorder %s26, 1
    %p206 = por %p204, %p205
    %p208 = scmp.ne.s32.totalorder %s193, %s207
    %p209 = scmp.eq.s32.totalorder %s26, 0
    %p210 = por %p208, %p209
    %s212 = sadd.s32 %s211, 1
    %p215 = scmp.eq.s32.totalorder %s20, 1
    %p216 = scmp.ne.s32.totalorder %s211, %s213
    %p217 = scmp.eq.s32.totalorder %s20, 0
    %p218 = por %p216, %p217
    %p219 = scmp.ne.s32.totalorder %s211, %s213
    %p220 = scmp.eq.s32.totalorder %s25, 1
    %p221 = por %p219, %p220
    %p222 = scmp.ne.s32.totalorder %s213, %s214
    %p223 = scmp.eq.s32.totalorder %s25, 0
    %p224 = por %p222, %p223
    %p225 = scmp.ne.s32.totalorder %s213, %s214
    %p226 = scmp.eq.s32.totalorder %s26, 1
    %p227 = por %p225, %p226
    %p229 = scmp.ne.s32.totalorder %s214, %s228
    %p230 = scmp.eq.s32.totalorder %s26, 0
    %p231 = por %p229, %p230
    %s233 = sadd.s32 %s232, 1
    %p236 = scmp.eq.s32.totalorder %s20, 1
    %p237 = scmp.ne.s32.totalorder %s232, %s234
    %p238 = scmp.eq.s32.totalorder %s20, 0
    %p239 = por %p237, %p238
    %p240 = scmp.ne.s32.totalorder %s232, %s234
    %p241 = scmp.eq.s32.totalorder %s25, 1
    %p242 = por %p240, %p241
    %p243 = scmp.ne.s32.totalorder %s234, %s235
    %p244 = scmp.eq.s32.totalorder %s25, 0
    %p245 = por %p243, %p244
    %p246 = scmp.ne.s32.totalorder %s234, %s235
    %p247 = scmp.eq.s32.totalorder %s26, 1
    %p248 = por %p246, %p247
    %p250 = scmp.ne.s32.totalorder %s235, %s249
    %p251 = scmp.eq.s32.totalorder %s26, 0
    %p252 = por %p250, %p251
    %s254 = sadd.s32 %s253, 1
    %p257 = scmp.eq.s32.totalorder %s20, 1
    %p258 = scmp.ne.s32.totalorder %s253, %s255
    %p259 = scmp.eq.s32.totalorder %s20, 0
    %p260 = por %p258, %p259
    %p261 = scmp.ne.s32.totalorder %s253, %s255
    %p262 = scmp.eq.s32.totalorder %s25, 1
    %p263 = por %p261, %p262
    %p264 = scmp.ne.s32.totalorder %s255, %s256
    %p265 = scmp.eq.s32.totalorder %s25, 0
    %p266 = por %p264, %p265
    %p267 = scmp.ne.s32.totalorder %s255, %s256
    %p268 = scmp.eq.s32.totalorder %s26, 1
    %p269 = por %p267, %p268
    %p271 = scmp.ne.s32.totalorder %s256, %s270
    %p272 = scmp.eq.s32.totalorder %s26, 0
    %p273 = por %p271, %p272
    %s275 = sadd.s32 %s274, 1
    %p278 = scmp.eq.s32.totalorder %s20, 1
    %p279 = scmp.ne.s32.totalorder %s274, %s276
    %p280 = scmp.eq.s32.totalorder %s20, 0
    %p281 = por %p279, %p280
    %p282 = scmp.ne.s32.totalorder %s274, %s276
    %p283 = scmp.eq.s32.totalorder %s25, 1
    %p284 = por %p282, %p283
    %p285 = scmp.ne.s32.totalorder %s276, %s277
    %p286 = scmp.eq.s32.totalorder %s25, 0
    %p287 = por %p285, %p286
    %p288 = scmp.ne.s32.totalorder %s276, %s277
    %p289 = scmp.eq.s32.totalorder %s26, 1
    %p290 = por %p288, %p289
    %p292 = scmp.ne.s32.totalorder %s277, %s291
    %p293 = scmp.eq.s32.totalorder %s26, 0
    %p294 = por %p292, %p293
    %s296 = sadd.s32 %s295, 1
    %p299 = scmp.eq.s32.totalorder %s20, 1
    %p300 = scmp.ne.s32.totalorder %s295, %s297
    %p301 = scmp.eq.s32.totalorder %s20, 0
    %p302 = por %p300, %p301
    %p303 = scmp.ne.s32.totalorder %s295, %s297
    %p304 = scmp.eq.s32.totalorder %s25, 1
    %p305 = por %p303, %p304
    %p306 = scmp.ne.s32.totalorder %s297, %s298
    %p307 = scmp.eq.s32.totalorder %s25, 0
    %p308 = por %p306, %p307
    %p309 = scmp.ne.s32.totalorder %s297, %s298
    %p310 = scmp.eq.s32.totalorder %s26, 1
    %p311 = por %p309, %p310
    %p313 = scmp.ne.s32.totalorder %s298, %s312
    %p314 = scmp.eq.s32.totalorder %s26, 0
    %p315 = por %p313, %p314
    %s317 = sadd.s32 %s316, 1
    %p320 = scmp.eq.s32.totalorder %s20, 1
    %p321 = scmp.ne.s32.totalorder %s316, %s318
    %p322 = scmp.eq.s32.totalorder %s20, 0
    %p323 = por %p321, %p322
    %p324 = scmp.ne.s32.totalorder %s316, %s318
    %p325 = scmp.eq.s32.totalorder %s25, 1
    %p326 = por %p324, %p325
    %p327 = scmp.ne.s32.totalorder %s318, %s319
    %p328 = scmp.eq.s32.totalorder %s25, 0
    %p329 = por %p327, %p328
    %p330 = scmp.ne.s32.totalorder %s318, %s319
    %p331 = scmp.eq.s32.totalorder %s26, 1
    %p332 = por %p330, %p331
    %p334 = scmp.ne.s32.totalorder %s319, %s333
    %p335 = scmp.eq.s32.totalorder %s26, 0
    %p336 = por %p334, %p335
    %s337 = ssub.s32 %s20, %s27
    %p338 = scmp.eq.s32.totalorder %s337, 0
    %s340 = sadd.s32 %s339, 1
    %s341 = scalar_select %p338, %s339, %s340
    %p344 = pneg %p338
    %p345 = scmp.eq.s32.totalorder %s20, 1
    %p346 = por %p344, %p345
    %p347 = scmp.ne.s32.totalorder %s339, %s342
    %p348 = scmp.eq.s32.totalorder %s20, 0
    %p349 = por %p347, %p348
    %p350 = scmp.ne.s32.totalorder %s339, %s342
    %p351 = scmp.eq.s32.totalorder %s25, 1
    %p352 = por %p350, %p351
    %p353 = scmp.ne.s32.totalorder %s342, %s343
    %p354 = scmp.eq.s32.totalorder %s25, 0
    %p355 = por %p353, %p354
    %p356 = scmp.ne.s32.totalorder %s342, %s343
    %p357 = scmp.eq.s32.totalorder %s26, 1
    %p358 = por %p356, %p357
    %p360 = scmp.ne.s32.totalorder %s343, %s359
    %p361 = scmp.eq.s32.totalorder %s26, 0
    %p362 = por %p360, %p361
    %p363 = scmp.le.s32.totalorder 1, %s20
    %p364 = scmp.lt.s32.totalorder %s20, 3
    %p365 = pnand %p363, %p364
    %p366 = pneg %p365
    // Predicated region
    $region9: #{tpu_custom_call.1} parent=5 // pred_check
      _
    $region10: #{tpu_custom_call.1} parent=5 // pred_check_branch
      %368 = sbr.rel (%p365) target = $region12
    $region11: #{tpu_custom_call.1} parent=5 // pred_region
      %s369 = ssub.s32 %s20, 1
      // Predicated region
      $region13: #{tpu_custom_call.1} parent=11 // pred_check
        %p370 = pneg %p119
      $region14: #{tpu_custom_call.1} parent=11 // pred_check_branch
        %372 = sbr.rel (%p370) target = $region16
      $region15: #{tpu_custom_call.1} parent=11 // pred_region
        _
      $region16: #{tpu_custom_call.1} parent=11 // pred_fallthru
        _
      // Predicated region
      $region17: #{tpu_custom_call.1} parent=11 // pred_check
        %p373 = pneg %p140
      $region18: #{tpu_custom_call.1} parent=11 // pred_check_branch
        %375 = sbr.rel (%p373) target = $region20
      $region19: #{tpu_custom_call.1} parent=11 // pred_region
        _
      $region20: #{tpu_custom_call.1} parent=11 // pred_fallthru
        _
      // Predicated region
      $region21: #{tpu_custom_call.1} parent=11 // pred_check
        %p376 = pneg %p161
      $region22: #{tpu_custom_call.1} parent=11 // pred_check_branch
        %378 = sbr.rel (%p376) target = $region24
      $region23: #{tpu_custom_call.1} parent=11 // pred_region
        _
      $region24: #{tpu_custom_call.1} parent=11 // pred_fallthru
        _
      // Predicated region
      $region25: #{tpu_custom_call.1} parent=11 // pred_check
        %p379 = pneg %p182
      $region26: #{tpu_custom_call.1} parent=11 // pred_check_branch
        %381 = sbr.rel (%p379) target = $region28
      $region27: #{tpu_custom_call.1} parent=11 // pred_region
        _
      $region28: #{tpu_custom_call.1} parent=11 // pred_fallthru
        _
      // Predicated region
      $region29: #{tpu_custom_call.1} parent=11 // pred_check
        %p382 = pneg %p203
      $region30: #{tpu_custom_call.1} parent=11 // pred_check_branch
        %384 = sbr.rel (%p382) target = $region32
      $region31: #{tpu_custom_call.1} parent=11 // pred_region
        _
      $region32: #{tpu_custom_call.1} parent=11 // pred_fallthru
        _
      // Predicated region
      $region33: #{tpu_custom_call.1} parent=11 // pred_check
        %p385 = pneg %p224
      $region34: #{tpu_custom_call.1} parent=11 // pred_check_branch
        %387 = sbr.rel (%p385) target = $region36
      $region35: #{tpu_custom_call.1} parent=11 // pred_region
        _
      $region36: #{tpu_custom_call.1} parent=11 // pred_fallthru
        _
      // Predicated region
      $region37: #{tpu_custom_call.1} parent=11 // pred_check
        %p388 = pneg %p245
      $region38: #{tpu_custom_call.1} parent=11 // pred_check_branch
        %390 = sbr.rel (%p388) target = $region40
      $region39: #{tpu_custom_call.1} parent=11 // pred_region
        _
      $region40: #{tpu_custom_call.1} parent=11 // pred_fallthru
        _
      // Predicated region
      $region41: #{tpu_custom_call.1} parent=11 // pred_check
        %p391 = pneg %p266
      $region42: #{tpu_custom_call.1} parent=11 // pred_check_branch
        %393 = sbr.rel (%p391) target = $region44
      $region43: #{tpu_custom_call.1} parent=11 // pred_region
        _
      $region44: #{tpu_custom_call.1} parent=11 // pred_fallthru
        _
      // Predicated region
      $region45: #{tpu_custom_call.1} parent=11 // pred_check
        %p394 = pneg %p287
      $region46: #{tpu_custom_call.1} parent=11 // pred_check_branch
        %396 = sbr.rel (%p394) target = $region48
      $region47: #{tpu_custom_call.1} parent=11 // pred_region
        _
      $region48: #{tpu_custom_call.1} parent=11 // pred_fallthru
        _
      // Predicated region
      $region49: #{tpu_custom_call.1} parent=11 // pred_check
        %p397 = pneg %p308
      $region50: #{tpu_custom_call.1} parent=11 // pred_check_branch
        %399 = sbr.rel (%p397) target = $region52
      $region51: #{tpu_custom_call.1} parent=11 // pred_region
        _
      $region52: #{tpu_custom_call.1} parent=11 // pred_fallthru
        _
      // Predicated region
      $region53: #{tpu_custom_call.1} parent=11 // pred_check
        %p400 = pneg %p329
      $region54: #{tpu_custom_call.1} parent=11 // pred_check_branch
        %402 = sbr.rel (%p400) target = $region56
      $region55: #{tpu_custom_call.1} parent=11 // pred_region
        _
      $region56: #{tpu_custom_call.1} parent=11 // pred_fallthru
        _
    $region12: #{tpu_custom_call.1} parent=5 // pred_fallthru
      _
    %p403 = scmp.lt.s32.totalorder %s20, 2
    // Predicated region
    $region57: #{tpu_custom_call.1} parent=5 // pred_check
      %p404 = pneg %p403
    $region58: #{tpu_custom_call.1} parent=5 // pred_check_branch
      %406 = sbr.rel (%p404) target = $region60
    $region59: #{tpu_custom_call.1} parent=5 // pred_region
      // Predicated region
      $region61: #{tpu_custom_call.1} parent=59 // pred_check
        %p407 = pneg %p40
      $region62: #{tpu_custom_call.1} parent=59 // pred_check_branch
        %409 = sbr.rel (%p407) target = $region64
      $region63: #{tpu_custom_call.1} parent=59 // pred_region
        %p410 = scmp.lt.s32.totalorder %s20, 1
        %s411 = scalar_select %p410, %s20, 1
        %s412 = smul.addr %s411, 8
        %s413 = scalar_lea.vmem %s0, %s412
      $region64: #{tpu_custom_call.1} parent=59 // pred_fallthru
        _
      // Predicated region
      $region65: #{tpu_custom_call.1} parent=59 // pred_check
        %p414 = pneg %p66
      $region66: #{tpu_custom_call.1} parent=59 // pred_check_branch
        %416 = sbr.rel (%p414) target = $region68
      $region67: #{tpu_custom_call.1} parent=59 // pred_region
        %p417 = scmp.lt.s32.totalorder %s20, 1
        %s418 = scalar_select %p417, %s20, 1
        %s419 = smul.addr %s418, 8
        %s420 = scalar_lea.vmem %s1, %s419
      $region68: #{tpu_custom_call.1} parent=59 // pred_fallthru
        _
      // Predicated region
      $region69: #{tpu_custom_call.1} parent=59 // pred_check
        %p421 = pneg %p92
      $region70: #{tpu_custom_call.1} parent=59 // pred_check_branch
        %423 = sbr.rel (%p421) target = $region72
      $region71: #{tpu_custom_call.1} parent=59 // pred_region
        %p424 = scmp.lt.s32.totalorder %s20, 1
        %s425 = scalar_select %p424, %s20, 1
        %s426 = smul.addr %s425, 8
        %s427 = scalar_lea.vmem %s2, %s426
      $region72: #{tpu_custom_call.1} parent=59 // pred_fallthru
        _
    $region60: #{tpu_custom_call.1} parent=5 // pred_fallthru
      _
    %p428 = scmp.le.s32.totalorder 1, %s20
    %p429 = scmp.lt.s32.totalorder %s20, 3
    %p430 = pnand %p428, %p429
    %p431 = pneg %p430
    // Predicated region
    $region73: #{tpu_custom_call.1} parent=5 // pred_check
      _
    $region74: #{tpu_custom_call.1} parent=5 // pred_check_branch
      %433 = sbr.rel (%p430) target = $region76
    $region75: #{tpu_custom_call.1} parent=5 // pred_region
      %s434 = ssub.s32 %s20, 1
      %p435 = scmp.lt.s32.totalorder %s25, 1
      %s436 = scalar_select %p435, %s25, 1
      %s437 = smul.addr %s436, 8
      %s438 = scalar_lea.vmem %s0, %s437
      %p439 = pneg %p46
      %p440 = pneg %p43
      %p441 = scmp.lt.s32.totalorder %s25, 1
      %s442 = scalar_select %p441, %s25, 1
      %s443 = smul.addr %s442, 8
      %s444 = scalar_lea.vmem %s1, %s443
      %p445 = pneg %p72
      %p446 = pneg %p69
      %p447 = scmp.lt.s32.totalorder %s25, 1
      %s448 = scalar_select %p447, %s25, 1
      %s449 = smul.addr %s448, 8
      %s450 = scalar_lea.vmem %s2, %s449
      %p451 = pneg %p98
      %p452 = pneg %p95
      %p453 = pneg %p119
      %p454 = pneg %p116
      %p455 = pneg %p140
      %p456 = pneg %p137
      %p457 = pneg %p161
      %p458 = pneg %p158
      %p459 = pneg %p182
      %p460 = pneg %p179
      %p461 = pneg %p203
      %p462 = pneg %p200
      %p463 = pneg %p224
      %p464 = pneg %p221
      %p465 = pneg %p245
      %p466 = pneg %p242
      %p467 = pneg %p266
      %p468 = pneg %p263
      %p469 = pneg %p287
      %p470 = pneg %p284
      %p471 = pneg %p308
      %p472 = pneg %p305
      %p473 = pneg %p329
      %p474 = pneg %p326
      %p475 = pneg %p355
      %p476 = pneg %p352
      %p477 = scmp.lt.s32.totalorder %s25, 1
      %s478 = scalar_select %p477, %s25, 1
      %s479 = smul.addr %s478, 8
      %s480 = scalar_lea.vmem %s14, %s479
      %p481 = scmp.lt.s32.totalorder %s25, 1
      %s482 = scalar_select %p481, %s25, 1
      %s483 = smul.addr %s482, 8
      %s484 = scalar_lea.vmem %s0, %s483
      %p485 = scmp.lt.s32.totalorder %s25, 1
      %s486 = scalar_select %p485, %s25, 1
      %s487 = smul.addr %s486, 8
      %s488 = scalar_lea.vmem %s1, %s487
      %p489 = scmp.lt.s32.totalorder %s25, 1
      %s490 = scalar_select %p489, %s25, 1
      %s491 = smul.addr %s490, 8
      %s492 = scalar_lea.vmem %s2, %s491
      %p493 = scmp.lt.s32.totalorder %s25, 1
      %s494 = scalar_select %p493, %s25, 1
      %s495 = smul.addr %s494, 8
      %s496 = scalar_lea.vmem %s14, %s495
      %v498 = vld [vmem:[%s484] sm:$0xff]
      %v499 = vpack.c.bf16 %v498, %v498
      %v500 = vld [vmem:[%s488] sm:$0xff]
      %v501 = vpack.c.bf16 %v500, %v500
      %v502 = vld [vmem:[%s492] sm:$0xff]
      %v503 = vld [vmem:[%s3] sm:$0xf]
      %v504 = vld [vmem:[%s3 + $0x4] sm:$0xf]
      %v505 = vld [vmem:[%s3 + $0x8] sm:$0xf]
      %v506 = vld [vmem:[%s3 + $0xc] sm:$0xf]
      %v507 = vld [vmem:[%s3 + $0x10] sm:$0xf]
      %v508 = vld [vmem:[%s3 + $0x14] sm:$0xf]
      %v509 = vld [vmem:[%s3 + $0x18] sm:$0xf]
      %v510 = vld [vmem:[%s3 + $0x1c] sm:$0xf]
      %v511 = vld [vmem:[%s4] sm:$0x1]
      %v513 = vlaneseq
      %v514 = vshrl.u32 %v513, 7
      %v515 = vsub.s32 0, %v514
      %v516 = vrot.slane %v511, %v515
      %v526 = vunpack.c.l.b16 %v503
      %v527 = vunpack.c.l.b16 %v504
      %v528 = vunpack.c.l.b16 %v505
      %v529 = vunpack.c.l.b16 %v506
      %v530 = vunpack.c.l.b16 %v507
      %v531 = vunpack.c.l.b16 %v508
      %v532 = vunpack.c.l.b16 %v509
      %v533 = vunpack.c.l.b16 %v510
      %v534 = vpack.c.b16 %v527, %v526
      %v535 = vpack.c.b16 %v529, %v528
      %v536 = vpack.c.b16 %v531, %v530
      %v537 = vpack.c.b16 %v533, %v532
      %vm542 = vcmask 523264
      %v544 = vsel %vm542, %v499, 0
      %546 = vmatprep.subr.bf16.mxu0 0
      %547 = vmatpush1.bf16.msra.mxu0 0
      %548 = vmatprep.subr.bf16.mxu0 0
      %549 = vmatpush1.bf16.msra.mxu0 0
      %550 = vmatprep.subr.bf16.mxu0 0
      %551 = vmatpush1.bf16.msra.mxu0 0
      %552 = vmatprep.subr.bf16.mxu0 0
      %553 = vmatpush1.bf16.msra.mxu0 0
      %554 = vmatprep.subr.bf16.mxu0 0
      %555 = vmatpush1.bf16.msra.mxu0 %v537
      %556 = vmatprep.subr.bf16.mxu0 0
      %557 = vmatpush1.bf16.msra.mxu0 %v536
      %558 = vmatprep.subr.bf16.mxu0 0
      %559 = vmatpush1.bf16.msra.mxu0 %v535
      %560 = vmatprep.subr.bf16.mxu0 0
      %561 = vmatpush1.bf16.msra.mxu0 %v534
      %562 = vmatprep.subr.bf16.mxu0 0
      %563 = vmatpush2.bf16.msra.mxu0 0
      %564 = vmatprep.subr.bf16.mxu0 0
      %565 = vmatpush2.bf16.msra.mxu0 0
      %566 = vmatprep.subr.bf16.mxu0 0
      %567 = vmatpush2.bf16.msra.mxu0 0
      %568 = vmatprep.subr.bf16.mxu0 0
      %569 = vmatpush2.bf16.msra.mxu0 0
      %570 = vmatprep.subr.bf16.mxu0 0
      %571 = vmatpush2.bf16.msra.mxu0 0
      %572 = vmatprep.subr.bf16.mxu0 0
      %573 = vmatpush2.bf16.msra.mxu0 0
      %574 = vmatprep.subr.bf16.mxu0 0
      %575 = vmatpush2.bf16.msra.mxu0 0
      %576 = vmatprep.subr.bf16.mxu0 0
      %577 = vmatpush2.bf16.msra.mxu0 0
      %578 = vmatprep.mubr.bf16.mxu0 0
      %579 = vmatmul.mubr.bf16.gmra.mxu0 %v544
      %v580 = vpop.f32.mrf.mxu0
      %v581 = vadd.f32 %v516, %v580
      %v582 = vpop.f32.mrf.mxu0
      %v583 = vpop.f32.mrf.mxu0
      %v584 = vpop.f32.mrf.mxu0
      %585 = vdwg.mxu0
      %v586 = vld [vmem:[%s5] sm:$0xf]
      %v587 = vld [vmem:[%s5 + $0x4] sm:$0xf]
      %v588 = vld [vmem:[%s5 + $0x8] sm:$0xf]
      %v589 = vld [vmem:[%s5 + $0xc] sm:$0xf]
      %v590 = vld [vmem:[%s5 + $0x10] sm:$0xf]
      %v591 = vld [vmem:[%s5 + $0x14] sm:$0xf]
      %v592 = vld [vmem:[%s5 + $0x18] sm:$0xf]
      %v593 = vld [vmem:[%s5 + $0x1c] sm:$0xf]
      %v594 = vld [vmem:[%s6] sm:$0x1]
      %v596 = vlaneseq
      %v597 = vshrl.u32 %v596, 7
      %v598 = vsub.s32 0, %v597
      %v599 = vrot.slane %v594, %v598
      %v609 = vunpack.c.l.b16 %v586
      %v610 = vunpack.c.l.b16 %v587
      %v611 = vunpack.c.l.b16 %v588
      %v612 = vunpack.c.l.b16 %v589
      %v613 = vunpack.c.l.b16 %v590
      %v614 = vunpack.c.l.b16 %v591
      %v615 = vunpack.c.l.b16 %v592
      %v616 = vunpack.c.l.b16 %v593
      %v617 = vpack.c.b16 %v610, %v609
      %v618 = vpack.c.b16 %v612, %v611
      %v619 = vpack.c.b16 %v614, %v613
      %v620 = vpack.c.b16 %v616, %v615
      %v626 = vsel %vm542, %v501, 0
      %628 = vmatprep.subr.bf16.mxu0 0
      %629 = vmatpush1.bf16.msra.mxu0 0
      %630 = vmatprep.subr.bf16.mxu0 0
      %631 = vmatpush1.bf16.msra.mxu0 0
      %632 = vmatprep.subr.bf16.mxu0 0
      %633 = vmatpush1.bf16.msra.mxu0 0
      %634 = vmatprep.subr.bf16.mxu0 0
      %635 = vmatpush1.bf16.msra.mxu0 0
      %636 = vmatprep.subr.bf16.mxu0 0
      %637 = vmatpush1.bf16.msra.mxu0 %v620
      %638 = vmatprep.subr.bf16.mxu0 0
      %639 = vmatpush1.bf16.msra.mxu0 %v619
      %640 = vmatprep.subr.bf16.mxu0 0
      %641 = vmatpush1.bf16.msra.mxu0 %v618
      %642 = vmatprep.subr.bf16.mxu0 0
      %643 = vmatpush1.bf16.msra.mxu0 %v617
      %644 = vmatprep.subr.bf16.mxu0 0
      %645 = vmatpush2.bf16.msra.mxu0 0
      %646 = vmatprep.subr.bf16.mxu0 0
      %647 = vmatpush2.bf16.msra.mxu0 0
      %648 = vmatprep.subr.bf16.mxu0 0
      %649 = vmatpush2.bf16.msra.mxu0 0
      %650 = vmatprep.subr.bf16.mxu0 0
      %651 = vmatpush2.bf16.msra.mxu0 0
      %652 = vmatprep.subr.bf16.mxu0 0
      %653 = vmatpush2.bf16.msra.mxu0 0
      %654 = vmatprep.subr.bf16.mxu0 0
      %655 = vmatpush2.bf16.msra.mxu0 0
      %656 = vmatprep.subr.bf16.mxu0 0
      %657 = vmatpush2.bf16.msra.mxu0 0
      %658 = vmatprep.subr.bf16.mxu0 0
      %659 = vmatpush2.bf16.msra.mxu0 0
      %660 = vmatprep.mubr.bf16.mxu0 0
      %661 = vmatmul.mubr.bf16.gmra.mxu0 %v626
      %v662 = vpop.f32.mrf.mxu0
      %v663 = vadd.f32 %v599, %v662
      %v664 = vpop.f32.mrf.mxu0
      %v665 = vpop.f32.mrf.mxu0
      %v666 = vpop.f32.mrf.mxu0
      %667 = vdwg.mxu0
      %v668 = vpack.c.bf16 %v581, %v581
      %v669 = vld [vmem:[%s11] sm:$0xf]
      %v670 = vld [vmem:[%s11 + $0x4] sm:$0xf]
      %v671 = vld [vmem:[%s11 + $0x8] sm:$0xf]
      %v672 = vld [vmem:[%s11 + $0xc] sm:$0xf]
      %v673 = vpack.c.bf16 %v663, %v663
      %v674 = vld [vmem:[%s12] sm:$0xf]
      %v675 = vld [vmem:[%s12 + $0x4] sm:$0xf]
      %v676 = vld [vmem:[%s12 + $0x8] sm:$0xf]
      %v677 = vld [vmem:[%s12 + $0xc] sm:$0xf]
      %v682 = vunpack.c.l.b16 %v674
      %v683 = vunpack.c.l.b16 %v675
      %v684 = vunpack.c.l.b16 %v676
      %v685 = vunpack.c.l.b16 %v677
      %v686 = vpack.c.b16 %v683, %v682
      %v687 = vpack.c.b16 %v685, %v684
      %vm690 = vcmask 261120
      %v692 = vsel %vm690, %v673, 0
      %694 = vmatprep.subr.bf16.mxu0 0
      %695 = vmatpush1.bf16.msra.mxu0 0
      %696 = vmatprep.subr.bf16.mxu0 0
      %697 = vmatpush1.bf16.msra.mxu0 0
      %698 = vmatprep.subr.bf16.mxu0 0
      %699 = vmatpush1.bf16.msra.mxu0 0
      %700 = vmatprep.subr.bf16.mxu0 0
      %701 = vmatpush1.bf16.msra.mxu0 0
      %702 = vmatprep.subr.bf16.mxu0 0
      %703 = vmatpush1.bf16.msra.mxu0 0
      %704 = vmatprep.subr.bf16.mxu0 0
      %705 = vmatpush1.bf16.msra.mxu0 0
      %706 = vmatprep.subr.bf16.mxu0 0
      %707 = vmatpush1.bf16.msra.mxu0 %v687
      %708 = vmatprep.subr.bf16.mxu0 0
      %709 = vmatpush1.bf16.msra.mxu0 %v686
      %710 = vmatprep.subr.bf16.mxu0 0
      %711 = vmatpush2.bf16.msra.mxu0 0
      %712 = vmatprep.subr.bf16.mxu0 0
      %713 = vmatpush2.bf16.msra.mxu0 0
      %714 = vmatprep.subr.bf16.mxu0 0
      %715 = vmatpush2.bf16.msra.mxu0 0
      %716 = vmatprep.subr.bf16.mxu0 0
      %717 = vmatpush2.bf16.msra.mxu0 0
      %718 = vmatprep.subr.bf16.mxu0 0
      %719 = vmatpush2.bf16.msra.mxu0 0
      %720 = vmatprep.subr.bf16.mxu0 0
      %721 = vmatpush2.bf16.msra.mxu0 0
      %722 = vmatprep.subr.bf16.mxu0 0
      %723 = vmatpush2.bf16.msra.mxu0 0
      %724 = vmatprep.subr.bf16.mxu0 0
      %725 = vmatpush2.bf16.msra.mxu0 0
      %726 = vmatprep.mubr.bf16.mxu0 0
      %727 = vmatmul.mubr.bf16.gmra.mxu0 %v692
      %v728 = vpop.f32.mrf.mxu0
      %v729 = vadd.f32 0.0, %v728
      %v730 = vpop.f32.mrf.mxu0
      %v731 = vpop.f32.mrf.mxu0
      %v732 = vpop.f32.mrf.mxu0
      %733 = vdwg.mxu0
      %v738 = vunpack.c.l.b16 %v669
      %v739 = vunpack.c.l.b16 %v670
      %v740 = vunpack.c.l.b16 %v671
      %v741 = vunpack.c.l.b16 %v672
      %v742 = vpack.c.b16 %v739, %v738
      %v743 = vpack.c.b16 %v741, %v740
      %v747 = vsel %vm690, %v668, 0
      %749 = vmatprep.subr.bf16.mxu0 0
      %750 = vmatpush1.bf16.msra.mxu0 0
      %751 = vmatprep.subr.bf16.mxu0 0
      %752 = vmatpush1.bf16.msra.mxu0 0
      %753 = vmatprep.subr.bf16.mxu0 0
      %754 = vmatpush1.bf16.msra.mxu0 0
      %755 = vmatprep.subr.bf16.mxu0 0
      %756 = vmatpush1.bf16.msra.mxu0 0
      %757 = vmatprep.subr.bf16.mxu0 0
      %758 = vmatpush1.bf16.msra.mxu0 0
      %759 = vmatprep.subr.bf16.mxu0 0
      %760 = vmatpush1.bf16.msra.mxu0 0
      %761 = vmatprep.subr.bf16.mxu0 0
      %762 = vmatpush1.bf16.msra.mxu0 %v743
      %763 = vmatprep.subr.bf16.mxu0 0
      %764 = vmatpush1.bf16.msra.mxu0 %v742
      %765 = vmatprep.subr.bf16.mxu0 0
      %766 = vmatpush2.bf16.msra.mxu0 0
      %767 = vmatprep.subr.bf16.mxu0 0
      %768 = vmatpush2.bf16.msra.mxu0 0
      %769 = vmatprep.subr.bf16.mxu0 0
      %770 = vmatpush2.bf16.msra.mxu0 0
      %771 = vmatprep.subr.bf16.mxu0 0
      %772 = vmatpush2.bf16.msra.mxu0 0
      %773 = vmatprep.subr.bf16.mxu0 0
      %774 = vmatpush2.bf16.msra.mxu0 0
      %775 = vmatprep.subr.bf16.mxu0 0
      %776 = vmatpush2.bf16.msra.mxu0 0
      %777 = vmatprep.subr.bf16.mxu0 0
      %778 = vmatpush2.bf16.msra.mxu0 0
      %779 = vmatprep.subr.bf16.mxu0 0
      %780 = vmatpush2.bf16.msra.mxu0 0
      %781 = vmatprep.mubr.bf16.mxu0 0
      %782 = vmatmul.mubr.bf16.gmra.mxu0 %v747
      %v783 = vpop.f32.mrf.mxu0
      %v784 = vadd.f32 %v729, %v783
      %v785 = vpop.f32.mrf.mxu0
      %v786 = vpop.f32.mrf.mxu0
      %v787 = vpop.f32.mrf.mxu0
      %788 = vdwg.mxu0
      %v789 = vld [vmem:[%s13] sm:$0x1]
      %v791 = vlaneseq
      %v792 = vshrl.u32 %v791, 7
      %v793 = vsub.s32 0, %v792
      %v794 = vrot.slane %v789, %v793
      %v796 = vadd.f32 %v784, %v794
      %v797 = vsub.f32 0.0, %v796
      %v798 = vmul.f32 %v797, 1.442695
      %v799 = vpow.pop %v798
      %v800 = vadd.f32 %v799, 1.0
      %v801 = vrcp.pop %v800
      %v802 = vpack.c.bf16 %v502, %v502
      %v803 = vld [vmem:[%s7] sm:$0xf]
      %v804 = vld [vmem:[%s7 + $0x4] sm:$0xf]
      %v805 = vld [vmem:[%s7 + $0x8] sm:$0xf]
      %v806 = vld [vmem:[%s7 + $0xc] sm:$0xf]
      %v807 = vld [vmem:[%s8] sm:$0x1]
      %v809 = vlaneseq
      %v810 = vshrl.u32 %v809, 7
      %v811 = vsub.s32 0, %v810
      %v812 = vrot.slane %v807, %v811
      %v818 = vunpack.c.l.b16 %v803
      %v819 = vunpack.c.l.b16 %v804
      %v820 = vunpack.c.l.b16 %v805
      %v821 = vunpack.c.l.b16 %v806
      %v822 = vpack.c.b16 %v819, %v818
      %v823 = vpack.c.b16 %v821, %v820
      %v827 = vsel %vm690, %v802, 0
      %829 = vmatprep.subr.bf16.mxu0 0
      %830 = vmatpush1.bf16.msra.mxu0 0
      %831 = vmatprep.subr.bf16.mxu0 0
      %832 = vmatpush1.bf16.msra.mxu0 0
      %833 = vmatprep.subr.bf16.mxu0 0
      %834 = vmatpush1.bf16.msra.mxu0 0
      %835 = vmatprep.subr.bf16.mxu0 0
      %836 = vmatpush1.bf16.msra.mxu0 0
      %837 = vmatprep.subr.bf16.mxu0 0
      %838 = vmatpush1.bf16.msra.mxu0 0
      %839 = vmatprep.subr.bf16.mxu0 0
      %840 = vmatpush1.bf16.msra.mxu0 0
      %841 = vmatprep.subr.bf16.mxu0 0
      %842 = vmatpush1.bf16.msra.mxu0 %v823
      %843 = vmatprep.subr.bf16.mxu0 0
      %844 = vmatpush1.bf16.msra.mxu0 %v822
      %845 = vmatprep.subr.bf16.mxu0 0
      %846 = vmatpush2.bf16.msra.mxu0 0
      %847 = vmatprep.subr.bf16.mxu0 0
      %848 = vmatpush2.bf16.msra.mxu0 0
      %849 = vmatprep.subr.bf16.mxu0 0
      %850 = vmatpush2.bf16.msra.mxu0 0
      %851 = vmatprep.subr.bf16.mxu0 0
      %852 = vmatpush2.bf16.msra.mxu0 0
      %853 = vmatprep.subr.bf16.mxu0 0
      %854 = vmatpush2.bf16.msra.mxu0 0
      %855 = vmatprep.subr.bf16.mxu0 0
      %856 = vmatpush2.bf16.msra.mxu0 0
      %857 = vmatprep.subr.bf16.mxu0 0
      %858 = vmatpush2.bf16.msra.mxu0 0
      %859 = vmatprep.subr.bf16.mxu0 0
      %860 = vmatpush2.bf16.msra.mxu0 0
      %861 = vmatprep.mubr.bf16.mxu0 0
      %862 = vmatmul.mubr.bf16.gmra.mxu0 %v827
      %v863 = vpop.f32.mrf.mxu0
      %v864 = vadd.f32 %v812, %v863
      %v865 = vpop.f32.mrf.mxu0
      %v866 = vpop.f32.mrf.mxu0
      %v867 = vpop.f32.mrf.mxu0
      %868 = vdwg.mxu0
      %v869 = vmul.f32 %v864, %v801
      %871 = vrot.lane.b32.xlu0 %v796, 108
      %v872 = vpop.permute.xlu0 %871
      %v874 = vadd.f32 %v869, %v872
      %v875 = vpack.c.bf16 %v874, %v874
      %v876 = vld [vmem:[%s9] sm:$0xf]
      %v877 = vld [vmem:[%s9 + $0x4] sm:$0xf]
      %v878 = vld [vmem:[%s10] sm:$0x1]
      %v880 = vlaneseq
      %v881 = vshrl.u32 %v880, 7
      %v882 = vsub.s32 0, %v881
      %v883 = vrot.slane %v878, %v882
      %v887 = vunpack.c.l.b16 %v876
      %v888 = vunpack.c.l.b16 %v877
      %v889 = vpack.c.b16 %v888, %v887
      %vm891 = vcmask 130048
      %v893 = vsel %vm891, %v875, 0
      %895 = vmatprep.subr.bf16.mxu0 0
      %896 = vmatpush1.bf16.msra.mxu0 0
      %897 = vmatprep.subr.bf16.mxu0 0
      %898 = vmatpush1.bf16.msra.mxu0 0
      %899 = vmatprep.subr.bf16.mxu0 0
      %900 = vmatpush1.bf16.msra.mxu0 0
      %901 = vmatprep.subr.bf16.mxu0 0
      %902 = vmatpush1.bf16.msra.mxu0 0
      %903 = vmatprep.subr.bf16.mxu0 0
      %904 = vmatpush1.bf16.msra.mxu0 0
      %905 = vmatprep.subr.bf16.mxu0 0
      %906 = vmatpush1.bf16.msra.mxu0 0
      %907 = vmatprep.subr.bf16.mxu0 0
      %908 = vmatpush1.bf16.msra.mxu0 0
      %909 = vmatprep.subr.bf16.mxu0 0
      %910 = vmatpush1.bf16.msra.mxu0 %v889
      %911 = vmatprep.subr.bf16.mxu0 0
      %912 = vmatpush2.bf16.msra.mxu0 0
      %913 = vmatprep.subr.bf16.mxu0 0
      %914 = vmatpush2.bf16.msra.mxu0 0
      %915 = vmatprep.subr.bf16.mxu0 0
      %916 = vmatpush2.bf16.msra.mxu0 0
      %917 = vmatprep.subr.bf16.mxu0 0
      %918 = vmatpush2.bf16.msra.mxu0 0
      %919 = vmatprep.subr.bf16.mxu0 0
      %920 = vmatpush2.bf16.msra.mxu0 0
      %921 = vmatprep.subr.bf16.mxu0 0
      %922 = vmatpush2.bf16.msra.mxu0 0
      %923 = vmatprep.subr.bf16.mxu0 0
      %924 = vmatpush2.bf16.msra.mxu0 0
      %925 = vmatprep.subr.bf16.mxu0 0
      %926 = vmatpush2.bf16.msra.mxu0 0
      %927 = vmatprep.mubr.bf16.mxu0 0
      %928 = vmatmul.mubr.bf16.gmra.mxu0 %v893
      %v929 = vpop.f32.mrf.mxu0
      %v930 = vadd.f32 %v883, %v929
      %v931 = vpop.f32.mrf.mxu0
      %v932 = vpop.f32.mrf.mxu0
      %v933 = vpop.f32.mrf.mxu0
      %934 = vdwg.mxu0
      %936 = vrot.lane.b32.xlu0 %v801, 112
      %v937 = vpop.permute.xlu0 %936
      %v939 = vmul.f32 %v930, %v937
      %940 = vrot.lane.b32.xlu0 %v796, 92
      %v941 = vpop.permute.xlu0 %940
      %v943 = vadd.f32 %v939, %v941
      %vm944 = vcmask 31744
      %945 = vst.msk [vmem:[%s496] sm:$0xff] %vm944, %v943
      %p946 = scmp.lt.s32.totalorder %s25, 1
      %s947 = scalar_select %p946, %s25, 1
      %s948 = smul.addr %s947, 8
      %s949 = scalar_lea.vmem %s14, %s948
      // Predicated region
      $region77: #{tpu_custom_call.1} parent=75 // pred_check
        %p950 = pneg %p352
      $region78: #{tpu_custom_call.1} parent=75 // pred_check_branch
        %952 = sbr.rel (%p950) target = $region80
      $region79: #{tpu_custom_call.1} parent=75 // pred_region
        _
      $region80: #{tpu_custom_call.1} parent=75 // pred_fallthru
        _
    $region76: #{tpu_custom_call.1} parent=5 // pred_fallthru
      _
    %p953 = scmp.le.s32.totalorder 2, %s20
    // Predicated region
    $region81: #{tpu_custom_call.1} parent=5 // pred_check
      %p954 = pneg %p953
    $region82: #{tpu_custom_call.1} parent=5 // pred_check_branch
      %956 = sbr.rel (%p954) target = $region84
    $region83: #{tpu_custom_call.1} parent=5 // pred_region
      %s957 = ssub.s32 %s20, 2
      // Predicated region
      $region85: #{tpu_custom_call.1} parent=83 // pred_check
        %p958 = pneg %p358
      $region86: #{tpu_custom_call.1} parent=83 // pred_check_branch
        %960 = sbr.rel (%p958) target = $region88
      $region87: #{tpu_custom_call.1} parent=83 // pred_region
        %p961 = scmp.lt.s32.totalorder %s26, 1
        %s962 = scalar_select %p961, %s26, 1
        %s963 = smul.addr %s962, 8
        %s964 = scalar_lea.vmem %s14, %s963
      $region88: #{tpu_custom_call.1} parent=83 // pred_fallthru
        _
    $region84: #{tpu_custom_call.1} parent=5 // pred_fallthru
      _
  $region6: #{tpu_custom_call.1} parent=0 // loop_footer
    %s24 = sadd.s32 1, %s20
  $region7: #{tpu_custom_call.1} parent=0 // loop_footer_branch
    %19 = sbr.rel target = $region3
  $region8: #{tpu_custom_call.1} parent=0 // loop_exit
    _

</llo_original>
